<compile_context>
chip_gen: v6e
topology: v6e:2x2x1
jax: 0.10.0
libtpu: 0.0.40
codegen_flags: <defaults>
</compile_context>

<pallas_src>
import jax
import jax.numpy as jnp
from jax.experimental import pallas as pl
from jax.experimental.pallas import tpu as pltpu


def _round_up(x, m):
    return ((x + m - 1) // m) * m


def _cdiv(a, b):
    return (a + b - 1) // b


def qnetwork_kernel(x_ref, w1_ref, b1_ref, w2_ref, b2_ref, w3_ref, b3_ref, o_ref):
    """Fused 3-layer MLP forward on one (TB, S) batch tile.

    x_ref : (TB, S) f32 state tile (cast to bf16 in-kernel, hidden under the MXU)
    w1/w2 : bf16 (MXU fast path);  w3 : f32 (final layer kept full precision)
    biases: f32; all matmul accumulation in f32 (preferred_element_type).
    """
    x = x_ref[...].astype(jnp.bfloat16)                                    # (TB, S)

    h1 = jnp.dot(x, w1_ref[...], preferred_element_type=jnp.float32) + b1_ref[...]
    h1 = jnp.maximum(h1, 0.0).astype(jnp.bfloat16)                         # (TB, 128)

    h2 = jnp.dot(h1, w2_ref[...], preferred_element_type=jnp.float32) + b2_ref[...]
    h2 = jnp.maximum(h2, 0.0)                                              # (TB, 128) f32

    out = jnp.dot(h2, w3_ref[...], preferred_element_type=jnp.float32) + b3_ref[...]
    o_ref[...] = out.astype(o_ref.dtype)                                   # (TB, A)


def qnetwork_forward(state, kparams, *, tb_max=2048):
    """state: (B, stateSize) f32.  kparams: un-padded weights (w1/w2 bf16, w3 f32).

    Returns (B, actionSize) f32 Q-values.
    """
    w1, b1 = kparams["w1"], kparams["b1"]
    w2, b2 = kparams["w2"], kparams["b2"]
    w3, b3 = kparams["w3"], kparams["b3"]

    B, S = state.shape
    H = w1.shape[1]
    A = w3.shape[1]

    # Batch tiling: over-pads by at most one 8-row sublane group; >= 2 tiles for
    # mid/large batches so the "parallel" grid axis can use both v7x TensorCores.
    n_tiles = max(_cdiv(B, tb_max), 2 if B > 1024 else 1)
    TB = _round_up(_cdiv(B, n_tiles), 8)
    B_pad = n_tiles * TB

    x = state if B_pad == B else jnp.pad(state, ((0, B_pad - B), (0, 0)))

    tile_spec = lambda shape: pl.BlockSpec(shape, lambda i: (i, 0))    # batch-tiled
    const_spec = lambda shape: pl.BlockSpec(shape, lambda i: (0, 0))   # VMEM-resident

    flops = 2 * B_pad * (S * H + H * H + H * A)
    bytes_accessed = (B_pad * (S + A) * 4                       # state in, Q out
                      + w1.size * 2 + w2.size * 2 + w3.size * 4  # weights (once)
                      + (b1.size + b2.size + b3.size) * 4)       # biases  (once)

    out = pl.pallas_call(
        qnetwork_kernel,
        out_shape=jax.ShapeDtypeStruct((B_pad, A), jnp.float32),
        grid=(n_tiles,),
        in_specs=[
            tile_spec((TB, S)),
            const_spec(w1.shape), const_spec(b1.shape),
            const_spec(w2.shape), const_spec(b2.shape),
            const_spec(w3.shape), const_spec(b3.shape),
        ],
        out_specs=tile_spec((TB, A)),
        compiler_params=pltpu.CompilerParams(
            dimension_semantics=("parallel",),   # shard batch tiles across TCs (v7x)
        ),
        cost_estimate=pl.CostEstimate(
            flops=flops, transcendentals=0, bytes_accessed=bytes_accessed),
    )(x, w1, b1, w2, b2, w3, b3)

    return out[:B]


def init_params(key, state_size, action_size, fc=(128, 128)):
    """f32 reference params mimicking nn.Linear default init (U[-1/sqrt(fan_in), +]).

    Weights are stored transposed: (in, out); biases as (1, out).
    """
    dims = [state_size, fc[0], fc[1], action_size]
    params = {}
    for i in range(3):
        fan_in, fan_out = dims[i], dims[i + 1]
        key, kw, kb = jax.random.split(key, 3)
        bound = 1.0 / jnp.sqrt(jnp.float32(fan_in))
        params[f"w{i+1}"] = jax.random.uniform(
            kw, (fan_in, fan_out), jnp.float32, -bound, bound)
        params[f"b{i+1}"] = jax.random.uniform(
            kb, (1, fan_out), jnp.float32, -bound, bound)
    return params


def prep_params_for_kernel(params):
    """No padding: layers 1-2 weights -> bf16 (MXU); final w3 and all biases stay f32."""
    return {
        "w1": params["w1"].astype(jnp.bfloat16),
        "b1": params["b1"],
        "w2": params["w2"].astype(jnp.bfloat16),
        "b2": params["b2"],
        "w3": params["w3"],
        "b3": params["b3"],
    }


def reference_forward(state, params):
    h1 = jnp.maximum(state @ params["w1"] + params["b1"], 0.0)
    h2 = jnp.maximum(h1 @ params["w2"] + params["b2"], 0.0)
    return h2 @ params["w3"] + params["b3"]


if __name__ == "__main__":
    key = jax.random.PRNGKey(0)
    B, STATE_SIZE, ACTION_SIZE = 8, 16, 4

    kx, kp = jax.random.split(key)
    state = jax.random.normal(kx, (B, STATE_SIZE), jnp.float32)

    ref_params = init_params(kp, STATE_SIZE, ACTION_SIZE)
    kernel_params = prep_params_for_kernel(ref_params)

    fwd = jax.jit(qnetwork_forward)
    out = fwd(state, kernel_params)
    out = jax.block_until_ready(out)

    ref = reference_forward(state, ref_params)
    assert out.shape == (B, ACTION_SIZE)
    # Layers 1-2 use bf16 MXU operands (f32 accumulation); final layer is f32.
    assert jnp.allclose(out, ref, atol=5e-2, rtol=5e-2), "mismatch vs reference"

    print("KERNEL_OK")
</pallas_src>

<mosaic_0001>
module attributes {stable_mosaic.version = 11 : i64} {
  func.func @qnetwork_kernel(%arg0: i32, %arg1: memref<8x16xf32, #tpu.memory_space<vmem>>, %arg2: memref<16x128xbf16, #tpu.memory_space<vmem>>, %arg3: memref<1x128xf32, #tpu.memory_space<vmem>>, %arg4: memref<128x128xbf16, #tpu.memory_space<vmem>>, %arg5: memref<1x128xf32, #tpu.memory_space<vmem>>, %arg6: memref<128x4xf32, #tpu.memory_space<vmem>>, %arg7: memref<1x4xf32, #tpu.memory_space<vmem>>, %arg8: memref<8x4xf32, #tpu.memory_space<vmem>>) attributes {dimension_semantics = [#tpu.dimension_semantics<parallel>], iteration_bounds = array<i64: 1>, scalar_prefetch = 0 : i64, scratch_operands = 0 : i64, tpu.core_type = #tpu.core_type<tc>, window_params = [{transform_indices = @transform_0, window_bounds = array<i64: 8, 16>}, {pipeline_mode = #tpu.pipeline_mode<synchronous>, transform_indices = @transform_1, window_bounds = array<i64: 16, 128>}, {pipeline_mode = #tpu.pipeline_mode<synchronous>, transform_indices = @transform_2, window_bounds = array<i64: 1, 128>}, {pipeline_mode = #tpu.pipeline_mode<synchronous>, transform_indices = @transform_3, window_bounds = array<i64: 128, 128>}, {pipeline_mode = #tpu.pipeline_mode<synchronous>, transform_indices = @transform_4, window_bounds = array<i64: 1, 128>}, {pipeline_mode = #tpu.pipeline_mode<synchronous>, transform_indices = @transform_5, window_bounds = array<i64: 128, 4>}, {pipeline_mode = #tpu.pipeline_mode<synchronous>, transform_indices = @transform_6, window_bounds = array<i64: 1, 4>}, {transform_indices = @transform_7, window_bounds = array<i64: 8, 4>}]} {
    %c0 = arith.constant 0 : index
    %c0_0 = arith.constant 0 : index
    %0 = vector.load %arg1[%c0, %c0_0] : memref<8x16xf32, #tpu.memory_space<vmem>>, vector<8x16xf32>
    %1 = arith.truncf %0 : vector<8x16xf32> to vector<8x16xbf16>
    %c0_1 = arith.constant 0 : index
    %c0_2 = arith.constant 0 : index
    %2 = vector.load %arg2[%c0_1, %c0_2] : memref<16x128xbf16, #tpu.memory_space<vmem>>, vector<16x128xbf16>
    %cst = arith.constant dense<0.000000e+00> : vector<8x128xf32>
    %3 = tpu.matmul %1, %2, %cst {dimension_numbers = #tpu.dot_dimension_numbers<[1], [0], [0], [1], [0, 0, 1, 1], [], []>} : vector<8x16xbf16>, vector<16x128xbf16>, vector<8x128xf32> -> vector<8x128xf32>
    %c0_3 = arith.constant 0 : index
    %c0_4 = arith.constant 0 : index
    %4 = vector.load %arg3[%c0_3, %c0_4] : memref<1x128xf32, #tpu.memory_space<vmem>>, vector<1x128xf32>
    %5 = vector.broadcast %4 : vector<1x128xf32> to vector<8x128xf32>
    %6 = arith.addf %3, %5 : vector<8x128xf32>
    %cst_5 = arith.constant 0.000000e+00 : f32
    %7 = vector.broadcast %cst_5 : f32 to vector<8x128xf32>
    %8 = arith.maximumf %6, %7 : vector<8x128xf32>
    %9 = arith.truncf %8 : vector<8x128xf32> to vector<8x128xbf16>
    %c0_6 = arith.constant 0 : index
    %c0_7 = arith.constant 0 : index
    %10 = vector.load %arg4[%c0_6, %c0_7] : memref<128x128xbf16, #tpu.memory_space<vmem>>, vector<128x128xbf16>
    %cst_8 = arith.constant dense<0.000000e+00> : vector<8x128xf32>
    %11 = tpu.matmul %9, %10, %cst_8 {dimension_numbers = #tpu.dot_dimension_numbers<[1], [0], [0], [1], [0, 0, 1, 1], [], []>} : vector<8x128xbf16>, vector<128x128xbf16>, vector<8x128xf32> -> vector<8x128xf32>
    %c0_9 = arith.constant 0 : index
    %c0_10 = arith.constant 0 : index
    %12 = vector.load %arg5[%c0_9, %c0_10] : memref<1x128xf32, #tpu.memory_space<vmem>>, vector<1x128xf32>
    %13 = vector.broadcast %12 : vector<1x128xf32> to vector<8x128xf32>
    %14 = arith.addf %11, %13 : vector<8x128xf32>
    %cst_11 = arith.constant 0.000000e+00 : f32
    %15 = vector.broadcast %cst_11 : f32 to vector<8x128xf32>
    %16 = arith.maximumf %14, %15 : vector<8x128xf32>
    %c0_12 = arith.constant 0 : index
    %c0_13 = arith.constant 0 : index
    %17 = vector.load %arg6[%c0_12, %c0_13] : memref<128x4xf32, #tpu.memory_space<vmem>>, vector<128x4xf32>
    %cst_14 = arith.constant dense<0.000000e+00> : vector<8x4xf32>
    %18 = tpu.matmul %16, %17, %cst_14 {dimension_numbers = #tpu.dot_dimension_numbers<[1], [0], [0], [1], [0, 0, 1, 1], [], []>} : vector<8x128xf32>, vector<128x4xf32>, vector<8x4xf32> -> vector<8x4xf32>
    %c0_15 = arith.constant 0 : index
    %c0_16 = arith.constant 0 : index
    %19 = vector.load %arg7[%c0_15, %c0_16] : memref<1x4xf32, #tpu.memory_space<vmem>>, vector<1x4xf32>
    %20 = vector.broadcast %19 : vector<1x4xf32> to vector<8x4xf32>
    %21 = arith.addf %18, %20 : vector<8x4xf32>
    %c0_17 = arith.constant 0 : index
    %c0_18 = arith.constant 0 : index
    %22 = vector.load %arg8[%c0_17, %c0_18] : memref<8x4xf32, #tpu.memory_space<vmem>>, vector<8x4xf32>
    tpu.vector_store %arg8[%c0_17, %c0_18], %21 {strides = array<i32>} : memref<8x4xf32, #tpu.memory_space<vmem>>, vector<8x4xf32>,
    return
  }
  func.func @transform_0(%arg0: i32) -> (i32, i32) {
    %c0_i32 = arith.constant 0 : i32
    %c0_i32_0 = arith.constant 0 : i32
    return %arg0, %c0_i32 : i32, i32
  }
  func.func @transform_1(%arg0: i32) -> (i32, i32) {
    %c0_i32 = arith.constant 0 : i32
    %c0_i32_0 = arith.constant 0 : i32
    %c0_i32_1 = arith.constant 0 : i32
    return %c0_i32, %c0_i32_0 : i32, i32
  }
  func.func @transform_2(%arg0: i32) -> (i32, i32) {
    %c0_i32 = arith.constant 0 : i32
    %c0_i32_0 = arith.constant 0 : i32
    %c0_i32_1 = arith.constant 0 : i32
    return %c0_i32, %c0_i32_0 : i32, i32
  }
  func.func @transform_3(%arg0: i32) -> (i32, i32) {
    %c0_i32 = arith.constant 0 : i32
    %c0_i32_0 = arith.constant 0 : i32
    %c0_i32_1 = arith.constant 0 : i32
    return %c0_i32, %c0_i32_0 : i32, i32
  }
  func.func @transform_4(%arg0: i32) -> (i32, i32) {
    %c0_i32 = arith.constant 0 : i32
    %c0_i32_0 = arith.constant 0 : i32
    %c0_i32_1 = arith.constant 0 : i32
    return %c0_i32, %c0_i32_0 : i32, i32
  }
  func.func @transform_5(%arg0: i32) -> (i32, i32) {
    %c0_i32 = arith.constant 0 : i32
    %c0_i32_0 = arith.constant 0 : i32
    %c0_i32_1 = arith.constant 0 : i32
    return %c0_i32, %c0_i32_0 : i32, i32
  }
  func.func @transform_6(%arg0: i32) -> (i32, i32) {
    %c0_i32 = arith.constant 0 : i32
    %c0_i32_0 = arith.constant 0 : i32
    %c0_i32_1 = arith.constant 0 : i32
    return %c0_i32, %c0_i32_0 : i32, i32
  }
  func.func @transform_7(%arg0: i32) -> (i32, i32) {
    %c0_i32 = arith.constant 0 : i32
    %c0_i32_0 = arith.constant 0 : i32
    return %arg0, %c0_i32 : i32, i32
  }
}

</mosaic_0001>

<llo_original>
// kernel: qnetwork_forward.1
$region0: #{qnetwork_forward.1}
  #allocation0 [shape = 'u32[]', space=smem, size = 0x4, offset = 0x4, fixed_abs, tag = 'smem constant byte address 0x4 - core index']
  #allocation1 [shape = 'u32[144,128]{1,0:T(1,128)}', space=vmem, size = 0x12000, scoped, tag = 'internal scratch']
  %s0 = inlined_call_operand.vmem [shape: f32[8,16], index: 0, kind: input, shape index: {}]
  %s1 = inlined_call_operand.vmem [shape: bf16[16,128], index: 1, kind: input, shape index: {}]
  %s2 = inlined_call_operand.vmem [shape: f32[1,128], index: 2, kind: input, shape index: {}]
  %s3 = inlined_call_operand.vmem [shape: bf16[128,128], index: 3, kind: input, shape index: {}]
  %s4 = inlined_call_operand.vmem [shape: f32[1,128], index: 4, kind: input, shape index: {}]
  %s5 = inlined_call_operand.vmem [shape: f32[128,4], index: 5, kind: input, shape index: {}]
  %s6 = inlined_call_operand.vmem [shape: f32[1,4], index: 6, kind: input, shape index: {}]
  %s7 = inlined_call_operand.vmem [shape: f32[8,4], index: 7, kind: output, shape index: {}]
  %s8 = sld [smem:[#allocation0]]
  $region38: #{qnetwork_forward.1} parent=0
    _
  %s10 = ssub.s32 1, %s8
  %s11 = scalar_select 0, %s10, %s8
  // Predicated region
  $region2: #{qnetwork_forward.1} parent=0 // pred_check
    _
  $region3: #{qnetwork_forward.1} parent=0 // pred_check_branch
    %13 = sbr.rel (0) target = $region5
  $region4: #{qnetwork_forward.1} parent=0 // pred_region
    _
  $region5: #{qnetwork_forward.1} parent=0 // pred_fallthru
    _
  // Predicated region
  $region6: #{qnetwork_forward.1} parent=0 // pred_check
    _
  $region7: #{qnetwork_forward.1} parent=0 // pred_check_branch
    %15 = sbr.rel (0) target = $region9
  $region8: #{qnetwork_forward.1} parent=0 // pred_region
    _
  $region9: #{qnetwork_forward.1} parent=0 // pred_fallthru
    _
  // Predicated region
  $region10: #{qnetwork_forward.1} parent=0 // pred_check
    _
  $region11: #{qnetwork_forward.1} parent=0 // pred_check_branch
    %17 = sbr.rel (0) target = $region13
  $region12: #{qnetwork_forward.1} parent=0 // pred_region
    _
  $region13: #{qnetwork_forward.1} parent=0 // pred_fallthru
    _
  // Predicated region
  $region14: #{qnetwork_forward.1} parent=0 // pred_check
    _
  $region15: #{qnetwork_forward.1} parent=0 // pred_check_branch
    %19 = sbr.rel (0) target = $region17
  $region16: #{qnetwork_forward.1} parent=0 // pred_region
    _
  $region17: #{qnetwork_forward.1} parent=0 // pred_fallthru
    _
  // Predicated region
  $region18: #{qnetwork_forward.1} parent=0 // pred_check
    _
  $region19: #{qnetwork_forward.1} parent=0 // pred_check_branch
    %21 = sbr.rel (0) target = $region21
  $region20: #{qnetwork_forward.1} parent=0 // pred_region
    _
  $region21: #{qnetwork_forward.1} parent=0 // pred_fallthru
    _
  // Predicated region
  $region22: #{qnetwork_forward.1} parent=0 // pred_check
    _
  $region23: #{qnetwork_forward.1} parent=0 // pred_check_branch
    %23 = sbr.rel (0) target = $region25
  $region24: #{qnetwork_forward.1} parent=0 // pred_region
    _
  $region25: #{qnetwork_forward.1} parent=0 // pred_fallthru
    _
  // Predicated region
  $region26: #{qnetwork_forward.1} parent=0 // pred_check
    _
  $region27: #{qnetwork_forward.1} parent=0 // pred_check_branch
    %25 = sbr.rel (0) target = $region29
  $region28: #{qnetwork_forward.1} parent=0 // pred_region
    _
  $region29: #{qnetwork_forward.1} parent=0 // pred_fallthru
    _
  %v27 = vld [vmem:[%s0] sm:$0xff]
  %v28 = vpack.c.bf16 %v27, %v27
  %v29 = vld [vmem:[%s1] sm:$0xf]
  %v30 = vld [vmem:[%s1 + $0x4] sm:$0xf]
  %v31 = vld [vmem:[%s2] sm:$0x1]
  %v33 = vlaneseq
  %v34 = vshrl.u32 %v33, 7
  %v35 = vsub.s32 0, %v34
  %v36 = vrot.slane %v31, %v35
  %v40 = vunpack.c.l.b16 %v29
  %v41 = vunpack.c.l.b16 %v30
  %v42 = vpack.c.b16 %v41, %v40
  %vm44 = vcmask 130048
  %v46 = vsel %vm44, %v28, 0
  %48 = vmatprep.subr.bf16.mxu0 0
  %49 = vmatpush1.bf16.msra.mxu0 0
  %50 = vmatprep.subr.bf16.mxu0 0
  %51 = vmatpush1.bf16.msra.mxu0 0
  %52 = vmatprep.subr.bf16.mxu0 0
  %53 = vmatpush1.bf16.msra.mxu0 0
  %54 = vmatprep.subr.bf16.mxu0 0
  %55 = vmatpush1.bf16.msra.mxu0 0
  %56 = vmatprep.subr.bf16.mxu0 0
  %57 = vmatpush1.bf16.msra.mxu0 0
  %58 = vmatprep.subr.bf16.mxu0 0
  %59 = vmatpush1.bf16.msra.mxu0 0
  %60 = vmatprep.subr.bf16.mxu0 0
  %61 = vmatpush1.bf16.msra.mxu0 0
  %62 = vmatprep.subr.bf16.mxu0 0
  %63 = vmatpush1.bf16.msra.mxu0 %v42
  %64 = vmatprep.subr.bf16.mxu0 0
  %65 = vmatpush2.bf16.msra.mxu0 0
  %66 = vmatprep.subr.bf16.mxu0 0
  %67 = vmatpush2.bf16.msra.mxu0 0
  %68 = vmatprep.subr.bf16.mxu0 0
  %69 = vmatpush2.bf16.msra.mxu0 0
  %70 = vmatprep.subr.bf16.mxu0 0
  %71 = vmatpush2.bf16.msra.mxu0 0
  %72 = vmatprep.subr.bf16.mxu0 0
  %73 = vmatpush2.bf16.msra.mxu0 0
  %74 = vmatprep.subr.bf16.mxu0 0
  %75 = vmatpush2.bf16.msra.mxu0 0
  %76 = vmatprep.subr.bf16.mxu0 0
  %77 = vmatpush2.bf16.msra.mxu0 0
  %78 = vmatprep.subr.bf16.mxu0 0
  %79 = vmatpush2.bf16.msra.mxu0 0
  %80 = vmatprep.mubr.bf16.mxu0 0
  %81 = vmatmul.mubr.bf16.gmra.mxu0 %v46
  %v82 = vpop.f32.mrf.mxu0
  %v83 = vadd.f32 %v36, %v82
  %v84 = vpop.f32.mrf.mxu0
  %v85 = vpop.f32.mrf.mxu0
  %v86 = vpop.f32.mrf.mxu0
  %87 = vdwg.mxu0
  %v88 = vmax.f32 %v83, 0.0
  %v89 = vpack.c.bf16 %v88, %v88
  %v90 = vld [vmem:[%s3] sm:$0xf]
  %v91 = vld [vmem:[%s3 + $0x4] sm:$0xf]
  %v92 = vld [vmem:[%s3 + $0x8] sm:$0xf]
  %v93 = vld [vmem:[%s3 + $0xc] sm:$0xf]
  %v94 = vld [vmem:[%s3 + $0x10] sm:$0xf]
  %v95 = vld [vmem:[%s3 + $0x14] sm:$0xf]
  %v96 = vld [vmem:[%s3 + $0x18] sm:$0xf]
  %v97 = vld [vmem:[%s3 + $0x1c] sm:$0xf]
  %v98 = vld [vmem:[%s3 + $0x20] sm:$0xf]
  %v99 = vld [vmem:[%s3 + $0x24] sm:$0xf]
  %v100 = vld [vmem:[%s3 + $0x28] sm:$0xf]
  %v101 = vld [vmem:[%s3 + $0x2c] sm:$0xf]
  %v102 = vld [vmem:[%s3 + $0x30] sm:$0xf]
  %v103 = vld [vmem:[%s3 + $0x34] sm:$0xf]
  %v104 = vld [vmem:[%s3 + $0x38] sm:$0xf]
  %v105 = vld [vmem:[%s3 + $0x3c] sm:$0xf]
  %v106 = vld [vmem:[%s4] sm:$0x1]
  %v108 = vlaneseq
  %v109 = vshrl.u32 %v108, 7
  %v110 = vsub.s32 0, %v109
  %v111 = vrot.slane %v106, %v110
  %v129 = vunpack.c.l.b16 %v90
  %v130 = vunpack.c.l.b16 %v91
  %v131 = vunpack.c.l.b16 %v92
  %v132 = vunpack.c.l.b16 %v93
  %v133 = vunpack.c.l.b16 %v94
  %v134 = vunpack.c.l.b16 %v95
  %v135 = vunpack.c.l.b16 %v96
  %v136 = vunpack.c.l.b16 %v97
  %v137 = vunpack.c.l.b16 %v98
  %v138 = vunpack.c.l.b16 %v99
  %v139 = vunpack.c.l.b16 %v100
  %v140 = vunpack.c.l.b16 %v101
  %v141 = vunpack.c.l.b16 %v102
  %v142 = vunpack.c.l.b16 %v103
  %v143 = vunpack.c.l.b16 %v104
  %v144 = vunpack.c.l.b16 %v105
  %v145 = vpack.c.b16 %v130, %v129
  %v146 = vpack.c.b16 %v132, %v131
  %v147 = vpack.c.b16 %v134, %v133
  %v148 = vpack.c.b16 %v136, %v135
  %v149 = vpack.c.b16 %v138, %v137
  %v150 = vpack.c.b16 %v140, %v139
  %v151 = vpack.c.b16 %v142, %v141
  %v152 = vpack.c.b16 %v144, %v143
  %161 = vmatprep.subr.bf16.mxu0 0
  %162 = vmatpush1.bf16.msra.mxu0 %v152
  %163 = vmatprep.subr.bf16.mxu0 0
  %164 = vmatpush1.bf16.msra.mxu0 %v151
  %165 = vmatprep.subr.bf16.mxu0 0
  %166 = vmatpush1.bf16.msra.mxu0 %v150
  %167 = vmatprep.subr.bf16.mxu0 0
  %168 = vmatpush1.bf16.msra.mxu0 %v149
  %169 = vmatprep.subr.bf16.mxu0 0
  %170 = vmatpush1.bf16.msra.mxu0 %v148
  %171 = vmatprep.subr.bf16.mxu0 0
  %172 = vmatpush1.bf16.msra.mxu0 %v147
  %173 = vmatprep.subr.bf16.mxu0 0
  %174 = vmatpush1.bf16.msra.mxu0 %v146
  %175 = vmatprep.subr.bf16.mxu0 0
  %176 = vmatpush1.bf16.msra.mxu0 %v145
  %177 = vmatprep.subr.bf16.mxu0 0
  %178 = vmatpush2.bf16.msra.mxu0 0
  %179 = vmatprep.subr.bf16.mxu0 0
  %180 = vmatpush2.bf16.msra.mxu0 0
  %181 = vmatprep.subr.bf16.mxu0 0
  %182 = vmatpush2.bf16.msra.mxu0 0
  %183 = vmatprep.subr.bf16.mxu0 0
  %184 = vmatpush2.bf16.msra.mxu0 0
  %185 = vmatprep.subr.bf16.mxu0 0
  %186 = vmatpush2.bf16.msra.mxu0 0
  %187 = vmatprep.subr.bf16.mxu0 0
  %188 = vmatpush2.bf16.msra.mxu0 0
  %189 = vmatprep.subr.bf16.mxu0 0
  %190 = vmatpush2.bf16.msra.mxu0 0
  %191 = vmatprep.subr.bf16.mxu0 0
  %192 = vmatpush2.bf16.msra.mxu0 0
  %193 = vmatprep.mubr.bf16.mxu0 0
  %194 = vmatmul.mubr.bf16.gmra.mxu0 %v89
  %v195 = vpop.f32.mrf.mxu0
  %v196 = vadd.f32 %v111, %v195
  %v197 = vpop.f32.mrf.mxu0
  %v198 = vpop.f32.mrf.mxu0
  %v199 = vpop.f32.mrf.mxu0
  %200 = vdwg.mxu0
  %v201 = vmax.f32 %v196, 0.0
  %v202 = vld [vmem:[%s5] sm:$0xff]
  %v203 = vld [vmem:[%s5 + $0x8] sm:$0xff]
  %v204 = vld [vmem:[%s5 + $0x10] sm:$0xff]
  %v205 = vld [vmem:[%s5 + $0x18] sm:$0xff]
  %v206 = vld [vmem:[%s5 + $0x20] sm:$0xff]
  %v207 = vld [vmem:[%s5 + $0x28] sm:$0xff]
  %v208 = vld [vmem:[%s5 + $0x30] sm:$0xff]
  %v209 = vld [vmem:[%s5 + $0x38] sm:$0xff]
  %v210 = vld [vmem:[%s5 + $0x40] sm:$0xff]
  %v211 = vld [vmem:[%s5 + $0x48] sm:$0xff]
  %v212 = vld [vmem:[%s5 + $0x50] sm:$0xff]
  %v213 = vld [vmem:[%s5 + $0x58] sm:$0xff]
  %v214 = vld [vmem:[%s5 + $0x60] sm:$0xff]
  %v215 = vld [vmem:[%s5 + $0x68] sm:$0xff]
  %v216 = vld [vmem:[%s5 + $0x70] sm:$0xff]
  %v217 = vld [vmem:[%s5 + $0x78] sm:$0xff]
  %v218 = vld [vmem:[%s6] sm:$0x1]
  %v220 = vlaneseq
  %v221 = vshrl.u32 %v220, 7
  %v222 = vsub.s32 0, %v221
  %v223 = vrot.slane %v218, %v222
  %225 = vmatprep.subr.mxu0 0.0
  %226 = vmatpush1.msra.mxu0 %v217
  %227 = vmatprep.subr.mxu0 0.0
  %228 = vmatpush1.msra.mxu0 %v216
  %229 = vmatprep.subr.mxu0 0.0
  %230 = vmatpush1.msra.mxu0 %v215
  %231 = vmatprep.subr.mxu0 0.0
  %232 = vmatpush1.msra.mxu0 %v214
  %233 = vmatprep.subr.mxu0 0.0
  %234 = vmatpush1.msra.mxu0 %v213
  %235 = vmatprep.subr.mxu0 0.0
  %236 = vmatpush1.msra.mxu0 %v212
  %237 = vmatprep.subr.mxu0 0.0
  %238 = vmatpush1.msra.mxu0 %v211
  %239 = vmatprep.subr.mxu0 0.0
  %240 = vmatpush1.msra.mxu0 %v210
  %241 = vmatprep.subr.mxu0 0.0
  %242 = vmatpush1.msra.mxu0 %v209
  %243 = vmatprep.subr.mxu0 0.0
  %244 = vmatpush1.msra.mxu0 %v208
  %245 = vmatprep.subr.mxu0 0.0
  %246 = vmatpush1.msra.mxu0 %v207
  %247 = vmatprep.subr.mxu0 0.0
  %248 = vmatpush1.msra.mxu0 %v206
  %249 = vmatprep.subr.mxu0 0.0
  %250 = vmatpush1.msra.mxu0 %v205
  %251 = vmatprep.subr.mxu0 0.0
  %252 = vmatpush1.msra.mxu0 %v204
  %253 = vmatprep.subr.mxu0 0.0
  %254 = vmatpush1.msra.mxu0 %v203
  %255 = vmatprep.subr.mxu0 0.0
  %256 = vmatpush1.msra.mxu0 %v202
  %257 = vmatprep.subr.mxu0 0.0
  %258 = vmatpush2.msra.mxu0 0.0
  %259 = vmatprep.subr.mxu0 0.0
  %260 = vmatpush2.msra.mxu0 0.0
  %261 = vmatprep.subr.mxu0 0.0
  %262 = vmatpush2.msra.mxu0 0.0
  %263 = vmatprep.subr.mxu0 0.0
  %264 = vmatpush2.msra.mxu0 0.0
  %265 = vmatprep.subr.mxu0 0.0
  %266 = vmatpush2.msra.mxu0 0.0
  %267 = vmatprep.subr.mxu0 0.0
  %268 = vmatpush2.msra.mxu0 0.0
  %269 = vmatprep.subr.mxu0 0.0
  %270 = vmatpush2.msra.mxu0 0.0
  %271 = vmatprep.subr.mxu0 0.0
  %272 = vmatpush2.msra.mxu0 0.0
  %273 = vmatprep.subr.mxu0 0.0
  %274 = vmatpush2.msra.mxu0 0.0
  %275 = vmatprep.subr.mxu0 0.0
  %276 = vmatpush2.msra.mxu0 0.0
  %277 = vmatprep.subr.mxu0 0.0
  %278 = vmatpush2.msra.mxu0 0.0
  %279 = vmatprep.subr.mxu0 0.0
  %280 = vmatpush2.msra.mxu0 0.0
  %281 = vmatprep.subr.mxu0 0.0
  %282 = vmatpush2.msra.mxu0 0.0
  %283 = vmatprep.subr.mxu0 0.0
  %284 = vmatpush2.msra.mxu0 0.0
  %285 = vmatprep.subr.mxu0 0.0
  %286 = vmatpush2.msra.mxu0 0.0
  %287 = vmatprep.subr.mxu0 0.0
  %288 = vmatpush2.msra.mxu0 0.0
  %289 = vmatprep.mubr.f32.mxu0 0.0
  %290 = vmatmul.mubr.f32.gmra.mxu0 %v201
  %v291 = vpop.f32.mrf.mxu0
  %v292 = vadd.f32 %v223, %v291
  %v293 = vpop.f32.mrf.mxu0
  %294 = vdwg.mxu0
  %vm295 = vcmask 31744
  %296 = vst.msk [vmem:[%s7] sm:$0xff] %vm295, %v292
  // Predicated region
  $region30: #{qnetwork_forward.1} parent=0 // pred_check
    _
  $region31: #{qnetwork_forward.1} parent=0 // pred_check_branch
    %298 = sbr.rel (0) target = $region33
  $region32: #{qnetwork_forward.1} parent=0 // pred_region
    _
  $region33: #{qnetwork_forward.1} parent=0 // pred_fallthru
    _
  // Predicated region
  $region34: #{qnetwork_forward.1} parent=0 // pred_check
    _
  $region35: #{qnetwork_forward.1} parent=0 // pred_check_branch
    %300 = sbr.rel (0) target = $region37
  $region36: #{qnetwork_forward.1} parent=0 // pred_region
    _
  $region37: #{qnetwork_forward.1} parent=0 // pred_fallthru
    _

</llo_original>
